<compile_context>
chip_gen: v7x
topology: tpu7x:2x2x1
jax: 0.10.0
libtpu: 0.0.40
codegen_flags: <defaults>
</compile_context>

<pallas_src>
import functools

import jax
import jax.numpy as jnp
from jax import lax
from jax.experimental import pallas as pl
from jax.experimental.pallas import tpu as pltpu


def _round_up(x, m):
    return ((x + m - 1) // m) * m


def _sublane(dtype):
    """Sublane packing minimum for the second-to-last dim: 8 f32, 16 bf16, 32 fp8."""
    return max(8, 32 // jnp.dtype(dtype).itemsize)


def _choose_tile(size, target, align):
    """Pick (tile, padded_extent): tile is a multiple of `align`, <= target,
    trading at most ~12.5% extra padding for fewer grid steps."""
    extent = _round_up(size, align)
    if extent <= target:
        return extent, extent
    best_t, best_pad = align, _round_up(extent, align)
    t = (target // align) * align
    while t >= align:
        padded = _round_up(extent, t)
        waste = padded - extent
        if waste * 8 <= extent:          # accept the largest tile with bounded waste
            return t, padded
        if padded < best_pad:
            best_t, best_pad = t, padded
        t -= align
    return best_t, best_pad


def _largest_divisor_tile(extent, align, max_tile):
    """Largest multiple of `align` that divides `extent` and is <= max_tile."""
    t = (min(max_tile, extent) // align) * align
    while t > align:
        if extent % t == 0:
            return t
        t -= align
    return align


# ---------------------------------------------------------------------------
# Kernels
# ---------------------------------------------------------------------------

def _bayes_linear_kernel_acc(x_ref, w_ref, bmu_ref, bls_ref, eps_ref, o_ref, acc_ref):
    """Multi-K-step variant: f32 VMEM accumulator, init at k==0, finalize at k==last."""
    k = pl.program_id(2)

    @pl.when(k == 0)
    def _init():
        acc_ref[...] = jnp.zeros_like(acc_ref)

    # W block is (tn, tk) in its native (out_f, in_f) layout: contract the minor
    # (K) dims of both tiles on the MXU -- no wrapper-side transpose of W.
    acc_ref[...] += lax.dot_general(
        x_ref[...], w_ref[...],
        dimension_numbers=(((1,), (1,)), ((), ())),
        preferred_element_type=jnp.float32,
    )

    @pl.when(k == pl.num_programs(2) - 1)
    def _finalize():
        # Reparameterized bias sample, f32, exp on the EUP slot.
        bias = bmu_ref[...] + jnp.exp(bls_ref[...]) * eps_ref[...]   # (1, tn)
        o_ref[...] = (acc_ref[...] + bias).astype(o_ref.dtype)


def _bayes_linear_kernel_noacc(x_ref, w_ref, bmu_ref, bls_ref, eps_ref, o_ref):
    """Single-K-step variant: no scratch accumulator, write the tile directly."""
    acc = lax.dot_general(
        x_ref[...], w_ref[...],
        dimension_numbers=(((1,), (1,)), ((), ())),
        preferred_element_type=jnp.float32,
    )
    bias = bmu_ref[...] + jnp.exp(bls_ref[...]) * eps_ref[...]       # (1, tn)
    o_ref[...] = (acc + bias).astype(o_ref.dtype)


# ---------------------------------------------------------------------------
# Parameter prep (run ONCE at setup -- keeps W pad/cast off the per-call path)
# ---------------------------------------------------------------------------

def prepare_bayes_linear_params(weight_mu, bias_mu, bias_log_sigma, *,
                                compute_dtype=jnp.bfloat16,
                                tn_target=512, tk_target=None):
    """Pad weights/biases to lane-dense tile multiples and cast W to the compute
    dtype (bf16 default; jnp.float8_e4m3fn is accepted on v7x). One-time cost."""
    out_f, in_f = weight_mu.shape
    if tk_target is None:
        tk_target = 2048 if jnp.dtype(compute_dtype).itemsize <= 2 else 1024
    tn, n_pad = _choose_tile(out_f, tn_target, 128)
    tk, k_pad = _choose_tile(in_f, tk_target, 128)

    w = jnp.pad(weight_mu, ((0, n_pad - out_f), (0, k_pad - in_f))).astype(compute_dtype)
    bmu = jnp.pad(bias_mu, (0, n_pad - out_f)).reshape(1, n_pad).astype(jnp.float32)
    bls = jnp.pad(bias_log_sigma, (0, n_pad - out_f)).reshape(1, n_pad).astype(jnp.float32)

    return {
        "weight": w,                      # (n_pad, k_pad), native layout, compute dtype
        "bias_mu": bmu,                   # (1, n_pad) f32
        "bias_log_sigma": bls,            # (1, n_pad) f32
        "out_features": out_f,
        "in_features": in_f,
        "tn": tn,
        "tk": tk,
        "compute_dtype": compute_dtype,
    }


# ---------------------------------------------------------------------------
# Forward
# ---------------------------------------------------------------------------

@functools.partial(
    jax.jit,
    static_argnames=("out_features", "tm", "tn", "tk", "m_pad", "compute_dtype"),
)
def _forward_impl(x, w_p, bmu_p, bls_p, eps, *,
                  out_features, tm, tn, tk, m_pad, compute_dtype):
    B, in_f = x.shape
    n_pad, k_pad = w_p.shape
    out_dtype = x.dtype

    # Per-call x/eps prep is tiny relative to the weight stream.
    x_p = jnp.pad(x, ((0, m_pad - B), (0, k_pad - in_f))).astype(compute_dtype)
    eps_p = jnp.pad(eps, (0, n_pad - out_features)).reshape(1, n_pad).astype(jnp.float32)

    m_tiles, n_tiles, k_steps = m_pad // tm, n_pad // tn, k_pad // tk

    # VMEM budget: actual double-buffered tile footprint, 2x headroom, <=32 MiB.
    cbytes = jnp.dtype(compute_dtype).itemsize
    obytes = jnp.dtype(out_dtype).itemsize
    vmem_need = 2 * (tm * tk * cbytes + tn * tk * cbytes + tm * tn * obytes
                     + 3 * 8 * tn * 4)
    if k_steps > 1:
        vmem_need += tm * tn * 4
    vmem_limit = int(min(32 * 1024 * 1024, max(4 * 1024 * 1024, 2 * vmem_need)))

    if k_steps == 1:
        kernel = _bayes_linear_kernel_noacc
        grid = (m_tiles, n_tiles)
        in_specs = [
            pl.BlockSpec((tm, tk), lambda i, j: (i, 0)),   # x tile
            pl.BlockSpec((tn, tk), lambda i, j: (j, 0)),   # W tile (native layout)
            pl.BlockSpec((1, tn), lambda i, j: (0, j)),    # bias_mu
            pl.BlockSpec((1, tn), lambda i, j: (0, j)),    # bias_log_sigma
            pl.BlockSpec((1, tn), lambda i, j: (0, j)),    # eps
        ]
        out_specs = pl.BlockSpec((tm, tn), lambda i, j: (i, j))
        scratch = []
        dims = ("parallel", "parallel")
    else:
        kernel = _bayes_linear_kernel_acc
        grid = (m_tiles, n_tiles, k_steps)
        in_specs = [
            pl.BlockSpec((tm, tk), lambda i, j, k: (i, k)),
            pl.BlockSpec((tn, tk), lambda i, j, k: (j, k)),
            pl.BlockSpec((1, tn), lambda i, j, k: (0, j)),
            pl.BlockSpec((1, tn), lambda i, j, k: (0, j)),
            pl.BlockSpec((1, tn), lambda i, j, k: (0, j)),
        ]
        out_specs = pl.BlockSpec((tm, tn), lambda i, j, k: (i, j))
        scratch = [pltpu.VMEM((tm, tn), jnp.float32)]
        dims = ("parallel", "parallel", "arbitrary")

    out_p = pl.pallas_call(
        kernel,
        out_shape=jax.ShapeDtypeStruct((m_pad, n_pad), out_dtype),
        grid_spec=pltpu.PrefetchScalarGridSpec(
            num_scalar_prefetch=0,
            grid=grid,
            in_specs=in_specs,
            out_specs=out_specs,
            scratch_shapes=scratch,
        ),
        compiler_params=pltpu.CompilerParams(
            dimension_semantics=dims,
            vmem_limit_bytes=vmem_limit,
        ),
    )(x_p, w_p, bmu_p, bls_p, eps_p)

    return out_p[:B, :out_features]


def bayes_linear_forward(x, params, eps, *, tm_target=512):
    """BayesLinear forward.

    x: (B, in_features); params: from prepare_bayes_linear_params;
    eps: (out_features,) standard-normal noise -- must be regenerated by the
    caller on every call (reparameterized sampling of the bias).
    """
    compute_dtype = params["compute_dtype"]
    tn, tk = params["tn"], params["tk"]
    n_pad, k_pad = params["weight"].shape

    B = x.shape[0]
    sub = _sublane(compute_dtype)                 # 8 f32 / 16 bf16 / 32 fp8
    tm, m_pad = _choose_tile(B, tm_target, sub)

    # v7x megacore: if the whole output fits in a single (tm, tn) tile, split N
    # (or M) so both TensorCores get a "parallel" tile.  Near-free elsewhere.
    if (m_pad // tm) * (n_pad // tn) == 1:
        if n_pad // 128 >= 2:
            tn = _largest_divisor_tile(n_pad, 128, n_pad // 2)
        elif m_pad // sub >= 2:
            tm = _largest_divisor_tile(m_pad, sub, m_pad // 2)

    return _forward_impl(
        x, params["weight"], params["bias_mu"], params["bias_log_sigma"], eps,
        out_features=params["out_features"],
        tm=tm, tn=tn, tk=tk, m_pad=m_pad, compute_dtype=compute_dtype,
    )


# ---------------------------------------------------------------------------
# Self-test
# ---------------------------------------------------------------------------

if __name__ == "__main__":
    key = jax.random.PRNGKey(0)
    (k_x, k_w, k_bmu, k_bls, k_eps,
     k_x2, k_w2, k_bmu2, k_bls2, k_eps2) = jax.random.split(key, 10)

    # --- Small shapes consistent with the module ---------------------------
    batch, in_features, out_features = 8, 32, 16
    x = jax.random.normal(k_x, (batch, in_features), dtype=jnp.float32)
    weight_mu = 0.1 * jax.random.normal(k_w, (out_features, in_features), dtype=jnp.float32)
    bias_mu = 0.1 * jax.random.normal(k_bmu, (out_features,), dtype=jnp.float32)
    bias_log_sigma = 0.1 * jax.random.normal(k_bls, (out_features,), dtype=jnp.float32) - 3.0
    # randn_like noise for the reparameterized bias (generated in glue code,
    # consumed inside the kernel's finalize).
    eps = jax.random.normal(k_eps, (out_features,), dtype=jnp.float32)

    ref = x @ weight_mu.T + (bias_mu + jnp.exp(bias_log_sigma) * eps)

    # 1) Default bf16 compute path (f32 accumulation): loose check.
    p_bf16 = prepare_bayes_linear_params(weight_mu, bias_mu, bias_log_sigma)
    out_bf16 = jax.block_until_ready(bayes_linear_forward(x, p_bf16, eps))
    assert out_bf16.shape == (batch, out_features)
    assert jnp.allclose(out_bf16, ref, atol=3e-2, rtol=3e-2), "bf16 mismatch vs reference"

    # 2) f32 path, single K step (scratch-free kernel variant): tight check.
    p_f32 = prepare_bayes_linear_params(weight_mu, bias_mu, bias_log_sigma,
                                        compute_dtype=jnp.float32)
    out_f32 = jax.block_until_ready(bayes_linear_forward(x, p_f32, eps))
    assert out_f32.shape == (batch, out_features)
    assert jnp.allclose(out_f32, ref, atol=1e-5, rtol=1e-5), "f32 mismatch vs reference"

    # 3) Multi-K accumulator path + non-tile-multiple M/N + N split heuristic.
    batch2, in_f2, out_f2 = 48, 384, 272
    x2 = jax.random.normal(k_x2, (batch2, in_f2), dtype=jnp.float32)
    w2 = 0.05 * jax.random.normal(k_w2, (out_f2, in_f2), dtype=jnp.float32)
    bmu2 = 0.1 * jax.random.normal(k_bmu2, (out_f2,), dtype=jnp.float32)
    bls2 = 0.1 * jax.random.normal(k_bls2, (out_f2,), dtype=jnp.float32) - 3.0
    eps2 = jax.random.normal(k_eps2, (out_f2,), dtype=jnp.float32)
    ref2 = x2 @ w2.T + (bmu2 + jnp.exp(bls2) * eps2)

    p2 = prepare_bayes_linear_params(w2, bmu2, bls2, compute_dtype=jnp.float32,
                                     tk_target=128)   # force 3 K steps
    out2 = jax.block_until_ready(bayes_linear_forward(x2, p2, eps2))
    assert out2.shape == (batch2, out_f2)
    assert jnp.allclose(out2, ref2, atol=1e-4, rtol=1e-4), "multi-K f32 mismatch vs reference"

    print("KERNEL_OK")
</pallas_src>

<mosaic_0001>
module attributes {stable_mosaic.version = 11 : i64} {
  func.func @_bayes_linear_kernel_noacc(%arg0: i32, %arg1: i32, %arg2: memref<16x128xbf16, #tpu.memory_space<vmem>>, %arg3: memref<128x128xbf16, #tpu.memory_space<vmem>>, %arg4: memref<1x128xf32, #tpu.memory_space<vmem>>, %arg5: memref<1x128xf32, #tpu.memory_space<vmem>>, %arg6: memref<1x128xf32, #tpu.memory_space<vmem>>, %arg7: memref<16x128xf32, #tpu.memory_space<vmem>>) attributes {dimension_semantics = [#tpu.dimension_semantics<parallel>, #tpu.dimension_semantics<parallel>], iteration_bounds = array<i64: 1, 1>, scalar_prefetch = 0 : i64, scratch_operands = 0 : i64, tpu.core_type = #tpu.core_type<tc>, window_params = [{transform_indices = @transform_0, window_bounds = array<i64: 16, 128>}, {transform_indices = @transform_1, window_bounds = array<i64: 128, 128>}, {transform_indices = @transform_2, window_bounds = array<i64: 1, 128>}, {transform_indices = @transform_3, window_bounds = array<i64: 1, 128>}, {transform_indices = @transform_4, window_bounds = array<i64: 1, 128>}, {transform_indices = @transform_5, window_bounds = array<i64: 16, 128>}]} {
    %c0 = arith.constant 0 : index
    %c0_0 = arith.constant 0 : index
    %0 = vector.load %arg2[%c0, %c0_0] : memref<16x128xbf16, #tpu.memory_space<vmem>>, vector<16x128xbf16>
    %c0_1 = arith.constant 0 : index
    %c0_2 = arith.constant 0 : index
    %1 = vector.load %arg3[%c0_1, %c0_2] : memref<128x128xbf16, #tpu.memory_space<vmem>>, vector<128x128xbf16>
    %cst = arith.constant dense<0.000000e+00> : vector<16x128xf32>
    %2 = tpu.matmul %0, %1, %cst {dimension_numbers = #tpu.dot_dimension_numbers<[1], [1], [0], [0], [0, 0, 1, 0], [], []>} : vector<16x128xbf16>, vector<128x128xbf16>, vector<16x128xf32> -> vector<16x128xf32>
    %c0_3 = arith.constant 0 : index
    %c0_4 = arith.constant 0 : index
    %3 = vector.load %arg4[%c0_3, %c0_4] : memref<1x128xf32, #tpu.memory_space<vmem>>, vector<1x128xf32>
    %c0_5 = arith.constant 0 : index
    %c0_6 = arith.constant 0 : index
    %4 = vector.load %arg5[%c0_5, %c0_6] : memref<1x128xf32, #tpu.memory_space<vmem>>, vector<1x128xf32>
    %5 = math.exp %4 : vector<1x128xf32>
    %c0_7 = arith.constant 0 : index
    %c0_8 = arith.constant 0 : index
    %6 = vector.load %arg6[%c0_7, %c0_8] : memref<1x128xf32, #tpu.memory_space<vmem>>, vector<1x128xf32>
    %7 = arith.mulf %5, %6 : vector<1x128xf32>
    %8 = arith.addf %3, %7 : vector<1x128xf32>
    %9 = vector.broadcast %8 : vector<1x128xf32> to vector<16x128xf32>
    %10 = arith.addf %2, %9 : vector<16x128xf32>
    %c0_9 = arith.constant 0 : index
    %c0_10 = arith.constant 0 : index
    %11 = vector.load %arg7[%c0_9, %c0_10] : memref<16x128xf32, #tpu.memory_space<vmem>>, vector<16x128xf32>
    tpu.vector_store %arg7[%c0_9, %c0_10], %10 {strides = array<i32>} : memref<16x128xf32, #tpu.memory_space<vmem>>, vector<16x128xf32>,
    return
  }
  func.func @transform_0(%arg0: i32, %arg1: i32) -> (i32, i32) {
    %c0_i32 = arith.constant 0 : i32
    %c0_i32_0 = arith.constant 0 : i32
    return %arg0, %c0_i32 : i32, i32
  }
  func.func @transform_1(%arg0: i32, %arg1: i32) -> (i32, i32) {
    %c0_i32 = arith.constant 0 : i32
    %c0_i32_0 = arith.constant 0 : i32
    return %arg1, %c0_i32 : i32, i32
  }
  func.func @transform_2(%arg0: i32, %arg1: i32) -> (i32, i32) {
    %c0_i32 = arith.constant 0 : i32
    %c0_i32_0 = arith.constant 0 : i32
    return %c0_i32, %arg1 : i32, i32
  }
  func.func @transform_3(%arg0: i32, %arg1: i32) -> (i32, i32) {
    %c0_i32 = arith.constant 0 : i32
    %c0_i32_0 = arith.constant 0 : i32
    return %c0_i32, %arg1 : i32, i32
  }
  func.func @transform_4(%arg0: i32, %arg1: i32) -> (i32, i32) {
    %c0_i32 = arith.constant 0 : i32
    %c0_i32_0 = arith.constant 0 : i32
    return %c0_i32, %arg1 : i32, i32
  }
  func.func @transform_5(%arg0: i32, %arg1: i32) -> (i32, i32) {
    %c0_i32 = arith.constant 0 : i32
    return %arg0, %arg1 : i32, i32
  }
}

</mosaic_0001>

<llo_original>
// kernel: _forward_impl.1
$region0: #{_forward_impl.1}
  #allocation0 [shape = 'u32[]', space=smem, size = 0x4, offset = 0x4, fixed_abs, tag = 'smem constant byte address 0x4 - core index']
  #allocation1 [shape = 'u32[144,128]{1,0:T(1,128)}', space=vmem, size = 0x12000, scoped, tag = 'internal scratch']
  %s0 = inlined_call_operand.vmem [shape: bf16[16,128], index: 0, kind: input, shape index: {}]
  %s1 = inlined_call_operand.hbm [shape: bf16[128,128], index: 1, kind: input, shape index: {}]
  %s2 = inlined_call_operand.vmem [shape: f32[1,128], index: 2, kind: input, shape index: {}]
  %s3 = inlined_call_operand.vmem [shape: f32[1,128], index: 3, kind: input, shape index: {}]
  %s4 = inlined_call_operand.vmem [shape: f32[1,128], index: 4, kind: input, shape index: {}]
  %s5 = inlined_call_operand.vmem [shape: f32[16,128], index: 5, kind: output, shape index: {}]
  %s6 = sld [smem:[#allocation0]]
  $region34: #{_forward_impl.1} parent=0
    _
  %s8 = ssub.s32 1, %s6
  %s9 = scalar_select 0, %s8, %s6
  $region1: #{_forward_impl.1} parent=0
    #allocation2 [shape = 'u8[32768]{0}', space=vmem, size = 0x8000, scoped, tag = 'input window, operand 1, single buffered']
    #allocation3 [shape = 's32[1]{0}', space=sflag, size = 0x4, scoped, tag = 'scoped memory for _forward_impl.1']
    %10 = vsyncpa [#allocation3], 0
    // Predicated region
    $region2: #{_forward_impl.1} parent=1 // pred_check
      _
    $region3: #{_forward_impl.1} parent=1 // pred_check_branch
      %12 = sbr.rel (0) target = $region5
    $region4: #{_forward_impl.1} parent=1 // pred_region
      _
    $region5: #{_forward_impl.1} parent=1 // pred_fallthru
      _
    // Predicated region
    $region6: #{_forward_impl.1} parent=1 // pred_check
      _
    $region7: #{_forward_impl.1} parent=1 // pred_check_branch
      %14 = sbr.rel (0) target = $region9
    $region8: #{_forward_impl.1} parent=1 // pred_region
      %s16 = ssub.s32 1024, 1024
      %17 = vsyncadd [#allocation3], %s16
      %s18 = sshll.u32 [#allocation2], 4
      %s19 = int_to_ptr.vmem [resolvable:$true] %s18
      %24 = dma.hbm_to_vmem [thread:$0]  %s1, 1024, %s19, [#allocation3], 64, 64, 4
    $region9: #{_forward_impl.1} parent=1 // pred_fallthru
      _
    // Predicated region
    $region10: #{_forward_impl.1} parent=1 // pred_check
      _
    $region11: #{_forward_impl.1} parent=1 // pred_check_branch
      %26 = sbr.rel (0) target = $region13
    $region12: #{_forward_impl.1} parent=1 // pred_region
      _
    $region13: #{_forward_impl.1} parent=1 // pred_fallthru
      _
    // Predicated region
    $region14: #{_forward_impl.1} parent=1 // pred_check
      _
    $region15: #{_forward_impl.1} parent=1 // pred_check_branch
      %28 = sbr.rel (0) target = $region17
    $region16: #{_forward_impl.1} parent=1 // pred_region
      _
    $region17: #{_forward_impl.1} parent=1 // pred_fallthru
      _
    // Predicated region
    $region18: #{_forward_impl.1} parent=1 // pred_check
      _
    $region19: #{_forward_impl.1} parent=1 // pred_check_branch
      %30 = sbr.rel (0) target = $region21
    $region20: #{_forward_impl.1} parent=1 // pred_region
      _
    $region21: #{_forward_impl.1} parent=1 // pred_fallthru
      _
    // Predicated region
    $region22: #{_forward_impl.1} parent=1 // pred_check
      _
    $region23: #{_forward_impl.1} parent=1 // pred_check_branch
      %32 = sbr.rel (0) target = $region25
    $region24: #{_forward_impl.1} parent=1 // pred_region
      %33 = dma.done [#allocation3], 1024
    $region25: #{_forward_impl.1} parent=1 // pred_fallthru
      _
    %v35 = vld [vmem:[%s0] sm:$0xf]
    %v36 = vld [vmem:[%s0 + $0x4] sm:$0xf]
    %v37 = vld [vmem:[#allocation2] sm:$0xf]
    %v38 = vld [vmem:[#allocation2 + $0x4] sm:$0xf]
    %v39 = vld [vmem:[#allocation2 + $0x8] sm:$0xf]
    %v40 = vld [vmem:[#allocation2 + $0xc] sm:$0xf]
    %v41 = vld [vmem:[#allocation2 + $0x10] sm:$0xf]
    %v42 = vld [vmem:[#allocation2 + $0x14] sm:$0xf]
    %v43 = vld [vmem:[#allocation2 + $0x18] sm:$0xf]
    %v44 = vld [vmem:[#allocation2 + $0x1c] sm:$0xf]
    %v45 = vld [vmem:[#allocation2 + $0x20] sm:$0xf]
    %v46 = vld [vmem:[#allocation2 + $0x24] sm:$0xf]
    %v47 = vld [vmem:[#allocation2 + $0x28] sm:$0xf]
    %v48 = vld [vmem:[#allocation2 + $0x2c] sm:$0xf]
    %v49 = vld [vmem:[#allocation2 + $0x30] sm:$0xf]
    %v50 = vld [vmem:[#allocation2 + $0x34] sm:$0xf]
    %v51 = vld [vmem:[#allocation2 + $0x38] sm:$0xf]
    %v52 = vld [vmem:[#allocation2 + $0x3c] sm:$0xf]
    %v53 = vld [vmem:[%s2] sm:$0x1]
    %v54 = vld [vmem:[%s3] sm:$0x1]
    %v55 = vmul.f32 %v54, 1.442695
    %v56 = vpow.pop %v55
    %v57 = vld [vmem:[%s4] sm:$0x1]
    %v58 = vmul.f32 %v56, %v57
    %v59 = vadd.f32 %v53, %v58
    %v61 = vlaneseq
    %v62 = vshrl.u32 %v61, 7
    %v63 = vsub.s32 0, %v62
    %v64 = vrot.slane %v59, %v63
    %v68 = vunpack.c.l.b16 %v35
    %v69 = vunpack.c.l.b16 %v36
    %v70 = vpack.c.b16 %v69, %v68
    %v88 = vunpack.c.l.b16 %v37
    %v89 = vunpack.c.l.b16 %v38
    %v90 = vunpack.c.l.b16 %v39
    %v91 = vunpack.c.l.b16 %v40
    %v92 = vunpack.c.l.b16 %v41
    %v93 = vunpack.c.l.b16 %v42
    %v94 = vunpack.c.l.b16 %v43
    %v95 = vunpack.c.l.b16 %v44
    %v96 = vunpack.c.l.b16 %v45
    %v97 = vunpack.c.l.b16 %v46
    %v98 = vunpack.c.l.b16 %v47
    %v99 = vunpack.c.l.b16 %v48
    %v100 = vunpack.c.l.b16 %v49
    %v101 = vunpack.c.l.b16 %v50
    %v102 = vunpack.c.l.b16 %v51
    %v103 = vunpack.c.l.b16 %v52
    %v104 = vpack.c.b16 %v89, %v88
    %v105 = vpack.c.b16 %v91, %v90
    %v106 = vpack.c.b16 %v93, %v92
    %v107 = vpack.c.b16 %v95, %v94
    %v108 = vpack.c.b16 %v97, %v96
    %v109 = vpack.c.b16 %v99, %v98
    %v110 = vpack.c.b16 %v101, %v100
    %v111 = vpack.c.b16 %v103, %v102
    %120 = vmatprep.subr.bf16.mxu0 0
    %121 = vmatpush1.bf16.xpose.msra.mxu0 %v104
    %122 = vmatprep.subr.bf16.mxu0 0
    %123 = vmatpush1.bf16.xpose.msra.mxu0 %v105
    %124 = vmatprep.subr.bf16.mxu0 0
    %125 = vmatpush1.bf16.xpose.msra.mxu0 %v106
    %126 = vmatprep.subr.bf16.mxu0 0
    %127 = vmatpush1.bf16.xpose.msra.mxu0 %v107
    %128 = vmatprep.subr.bf16.mxu0 0
    %129 = vmatpush1.bf16.xpose.msra.mxu0 %v108
    %130 = vmatprep.subr.bf16.mxu0 0
    %131 = vmatpush1.bf16.xpose.msra.mxu0 %v109
    %132 = vmatprep.subr.bf16.mxu0 0
    %133 = vmatpush1.bf16.xpose.msra.mxu0 %v110
    %134 = vmatprep.subr.bf16.mxu0 0
    %135 = vmatpush1.bf16.xpose.msra.mxu0 %v111
    %136 = vmatprep.subr.bf16.mxu0 0
    %137 = vmatpush1.bf16.xpose.msra.mxu0 0
    %138 = vmatprep.subr.bf16.mxu0 0
    %139 = vmatpush1.bf16.xpose.msra.mxu0 0
    %140 = vmatprep.subr.bf16.mxu0 0
    %141 = vmatpush1.bf16.xpose.msra.mxu0 0
    %142 = vmatprep.subr.bf16.mxu0 0
    %143 = vmatpush1.bf16.xpose.msra.mxu0 0
    %144 = vmatprep.subr.bf16.mxu0 0
    %145 = vmatpush1.bf16.xpose.msra.mxu0 0
    %146 = vmatprep.subr.bf16.mxu0 0
    %147 = vmatpush1.bf16.xpose.msra.mxu0 0
    %148 = vmatprep.subr.bf16.mxu0 0
    %149 = vmatpush1.bf16.xpose.msra.mxu0 0
    %150 = vmatprep.subr.bf16.mxu0 0
    %151 = vmatpush1.bf16.xpose.msra.mxu0 0
    %152 = vmatprep.mubr.bf16.mxu0 0
    %153 = vmatmul.mubr.bf16.gmra.mrb[0].mxu0 %v70
    %v154 = vpop.f32.mrb[0].mxu0
    %v155 = vadd.f32 %v64, %v154
    %v156 = vpop.f32.mrb[0].mxu0
    %v157 = vpop.f32.mrb[0].mxu0
    %v158 = vadd.f32 %v64, %v157
    %v159 = vpop.f32.mrb[0].mxu0
    %160 = vdwg.mxu0
    %161 = vst [vmem:[%s5] sm:$0xff] %v155
    %162 = vst [vmem:[%s5 + $0x8] sm:$0xff] %v158
    // Predicated region
    $region26: #{_forward_impl.1} parent=1 // pred_check
      _
    $region27: #{_forward_impl.1} parent=1 // pred_check_branch
      %164 = sbr.rel (0) target = $region29
    $region28: #{_forward_impl.1} parent=1 // pred_region
      _
    $region29: #{_forward_impl.1} parent=1 // pred_fallthru
      _
    // Predicated region
    $region30: #{_forward_impl.1} parent=1 // pred_check
      _
    $region31: #{_forward_impl.1} parent=1 // pred_check_branch
      %166 = sbr.rel (0) target = $region33
    $region32: #{_forward_impl.1} parent=1 // pred_region
      _
    $region33: #{_forward_impl.1} parent=1 // pred_fallthru
      _
    %167 = vsyncpa [#allocation3], 1

</llo_original>
